<compile_context>
chip_gen: v7x
topology: tpu7x:2x2x1
jax: 0.10.0
libtpu: 0.0.40
codegen_flags: <defaults>
</compile_context>

<pallas_src>
import math

import jax
import jax.numpy as jnp
from jax import lax
from jax.experimental import pallas as pl
from jax.experimental.pallas import tpu as pltpu


def _round_up(x: int, m: int) -> int:
    return (x + m - 1) // m * m


def token_embedding(tokens: jax.Array, emb_table: jax.Array,
                    *, max_tile: int = 512, one_hot_max_vocab: int = 2048) -> jax.Array:
    """Pallas implementation of TokenEmbedding.forward.

    tokens:    integer array of any shape (e.g. (batch, seq))
    emb_table: (vocab_size, emb_size) float array
    returns:   tokens.shape + (emb_size,) array in emb_table.dtype
    """
    V, E = emb_table.shape
    tab_dtype = emb_table.dtype
    itemsize = jnp.dtype(tab_dtype).itemsize
    scale = math.sqrt(E)

    tok_shape = tokens.shape
    N = int(math.prod(tok_shape)) if tok_shape else 1

    # ---- token tile (lane/sublane dense output, amortized grid overhead) ----
    if N >= max_tile:
        T = max_tile                        # multiple of 8 and 128
    else:
        T = _round_up(max(N, 1), 8)         # single tile, sublane aligned
    N_pad = _round_up(N, T)
    G = N_pad // T

    flat_ids = tokens.reshape(-1).astype(jnp.int32)   # tokens.long() equivalent
    if N_pad != N:
        flat_ids = jnp.pad(flat_ids, (0, N_pad - N))  # tail gathers row 0; sliced off below
    ids2d = flat_ids.reshape(N_pad, 1)                # (T, 1) blocks -> VMEM column per tile

    # ---- gather strategy -----------------------------------------------------
    use_one_hot = V <= one_hot_max_vocab
    if use_one_hot:
        V_blk = _round_up(V, 128)                     # MXU-friendly contraction dim
        tab_in = emb_table if V_blk == V else jnp.pad(emb_table, ((0, V_blk - V), (0, 0)))
    else:
        V_blk = V
        tab_in = emb_table
    fold_scale = use_one_hot and tab_dtype == jnp.float32

    def kernel(ids_ref, tab_ref, out_ref):
        # ids_ref: (T, 1) int32   tab_ref: (V_blk, E) resident   out_ref: (T, E)
        ids = jnp.clip(ids_ref[...], 0, V - 1)        # guard OOB ids (no HW bounds check)
        if use_one_hot:
            col = lax.broadcasted_iota(jnp.int32, (T, V_blk), 1)
            if fold_scale:
                # sqrt(E) folded into the one-hot -> scale is free on the MXU.
                hot = jnp.where(col == ids, jnp.float32(scale), jnp.float32(0.0))
            else:
                hot = (col == ids).astype(tab_dtype)  # exact 1.0, scale applied in f32 below
            acc = jnp.dot(hot, tab_ref[...], preferred_element_type=jnp.float32)
            if not fold_scale:
                acc = acc * scale                     # one VPU pass over the (T, E) tile
        else:
            # Vectorized gather on the VMEM-resident table (large vocab path).
            rows = jnp.take(tab_ref[...], ids[:, 0], axis=0)      # (T, E)
            acc = rows.astype(jnp.float32) * scale
        out_ref[...] = acc.astype(out_ref.dtype)

    # ---- VMEM budget (generation-aware) -------------------------------------
    table_vmem = 2 * V_blk * E * itemsize             # conservative: assume 2 table buffers
    ids_vmem = 2 * T * 128 * 4                        # (T,1) int32 lane-padded, double buffered
    out_vmem = 2 * T * E * itemsize
    hot_vmem = T * V_blk * 4 if use_one_hot else 0
    vmem_needed = table_vmem + ids_vmem + out_vmem + hot_vmem + (2 << 20)

    try:
        vmem_cap = int(pltpu.get_tpu_info().vmem_capacity_bytes)
    except Exception:
        vmem_cap = 64 << 20                           # v7x per-TC floor
    vmem_budget = int(vmem_cap * 0.85)
    if vmem_needed > vmem_budget:
        # TODO(synk): switch to HBM row-gather (pl.ANY + make_async_copy double buffer).
        raise NotImplementedError(
            f"embedding table needs ~{vmem_needed >> 20} MiB VMEM; budget is "
            f"{vmem_budget >> 20} MiB — HBM row-gather fallback not implemented")
    vmem_limit = min(max(vmem_needed, 32 << 20), vmem_budget)

    # ---- megacore: only split when output traffic dominates the table read ---
    out_hbm = N_pad * E * itemsize
    table_hbm = V_blk * E * itemsize
    dims = ("parallel",) if (G > 1 and out_hbm >= table_hbm) else ("arbitrary",)

    cost = pl.CostEstimate(
        flops=(2 * N_pad * V_blk * E) if use_one_hot else (N_pad * E),
        transcendentals=0,
        bytes_accessed=table_hbm + N_pad * 4 + out_hbm,
    )

    out_flat = pl.pallas_call(
        kernel,
        out_shape=jax.ShapeDtypeStruct((N_pad, E), tab_dtype),
        grid_spec=pltpu.PrefetchScalarGridSpec(
            num_scalar_prefetch=0,
            grid=(G,),
            in_specs=[
                pl.BlockSpec((T, 1), lambda i: (i, 0)),       # per-tile ids (VMEM)
                pl.BlockSpec((V_blk, E), lambda i: (0, 0)),   # table resident in VMEM
            ],
            out_specs=pl.BlockSpec((T, E), lambda i: (i, 0)),
        ),
        compiler_params=pltpu.CompilerParams(
            dimension_semantics=dims, vmem_limit_bytes=vmem_limit),
        cost_estimate=cost,
    )(ids2d, tab_in)

    return out_flat[:N].reshape(*tok_shape, E)


if __name__ == "__main__":
    # Small, deterministic setup consistent with the module's __init__.
    vocab_size = 64
    emb_size = 128          # lane-aligned embedding dim
    batch, seq = 2, 8

    key = jax.random.PRNGKey(0)
    k_emb, k_tok = jax.random.split(key)

    # nn.Embedding weight ~ N(0, 1) by default; initialized deterministically.
    emb_table = jax.random.normal(k_emb, (vocab_size, emb_size), dtype=jnp.float32)
    tokens = jax.random.randint(k_tok, (batch, seq), 0, vocab_size, dtype=jnp.int32)

    out = token_embedding(tokens, emb_table)
    out = jax.block_until_ready(out)

    # Reference check (plain JAX) for the same semantics.
    ref = jnp.take(emb_table, tokens, axis=0) * math.sqrt(emb_size)
    assert out.shape == (batch, seq, emb_size)
    assert jnp.allclose(out, ref, atol=1e-5, rtol=1e-5)

    print("KERNEL_OK")
</pallas_src>

<mosaic_0001>
module attributes {stable_mosaic.version = 11 : i64} {
  func.func @kernel(%arg0: i32, %arg1: memref<16x1xi32, #tpu.memory_space<vmem>>, %arg2: memref<128x128xf32, #tpu.memory_space<vmem>>, %arg3: memref<16x128xf32, #tpu.memory_space<vmem>>) attributes {dimension_semantics = [#tpu.dimension_semantics<arbitrary>], iteration_bounds = array<i64: 1>, scalar_prefetch = 0 : i64, scratch_operands = 0 : i64, tpu.core_type = #tpu.core_type<tc>, window_params = [{transform_indices = @transform_0, window_bounds = array<i64: 16, 1>}, {pipeline_mode = #tpu.pipeline_mode<synchronous>, transform_indices = @transform_1, window_bounds = array<i64: 128, 128>}, {transform_indices = @transform_2, window_bounds = array<i64: 16, 128>}]} {
    %c0 = arith.constant 0 : index
    %c0_0 = arith.constant 0 : index
    %0 = vector.load %arg1[%c0, %c0_0] : memref<16x1xi32, #tpu.memory_space<vmem>>, vector<16x1xi32>
    %c0_i32 = arith.constant 0 : i32
    %c63_i32 = arith.constant 63 : i32
    %1 = vector.broadcast %c0_i32 : i32 to vector<16x1xi32>
    %2 = arith.maxsi %1, %0 : vector<16x1xi32>
    %3 = vector.broadcast %c63_i32 : i32 to vector<16x1xi32>
    %4 = arith.minsi %3, %2 : vector<16x1xi32>
    %5 = tpu.iota {dimensions = array<i32: 1>} : vector<16x128xi32>
    %6 = vector.broadcast %4 : vector<16x1xi32> to vector<16x128xi32>
    %7 = arith.cmpi eq, %5, %6 : vector<16x128xi32>
    %cst = arith.constant 11.3137083 : f32
    %cst_1 = arith.constant 0.000000e+00 : f32
    %8 = vector.broadcast %cst : f32 to vector<16x128xf32>
    %9 = vector.broadcast %cst_1 : f32 to vector<16x128xf32>
    %10 = arith.select %7, %8, %9 : vector<16x128xi1>, vector<16x128xf32>
    %c0_2 = arith.constant 0 : index
    %c0_3 = arith.constant 0 : index
    %11 = vector.load %arg2[%c0_2, %c0_3] : memref<128x128xf32, #tpu.memory_space<vmem>>, vector<128x128xf32>
    %cst_4 = arith.constant dense<0.000000e+00> : vector<16x128xf32>
    %12 = tpu.matmul %10, %11, %cst_4 {dimension_numbers = #tpu.dot_dimension_numbers<[1], [0], [0], [1], [0, 0, 1, 1], [], []>} : vector<16x128xf32>, vector<128x128xf32>, vector<16x128xf32> -> vector<16x128xf32>
    %c0_5 = arith.constant 0 : index
    %c0_6 = arith.constant 0 : index
    %13 = vector.load %arg3[%c0_5, %c0_6] : memref<16x128xf32, #tpu.memory_space<vmem>>, vector<16x128xf32>
    tpu.vector_store %arg3[%c0_5, %c0_6], %12 {strides = array<i32>} : memref<16x128xf32, #tpu.memory_space<vmem>>, vector<16x128xf32>,
    return
  }
  func.func @transform_0(%arg0: i32) -> (i32, i32) {
    %c0_i32 = arith.constant 0 : i32
    %c0_i32_0 = arith.constant 0 : i32
    return %arg0, %c0_i32 : i32, i32
  }
  func.func @transform_1(%arg0: i32) -> (i32, i32) {
    %c0_i32 = arith.constant 0 : i32
    %c0_i32_0 = arith.constant 0 : i32
    %c0_i32_1 = arith.constant 0 : i32
    return %c0_i32, %c0_i32_0 : i32, i32
  }
  func.func @transform_2(%arg0: i32) -> (i32, i32) {
    %c0_i32 = arith.constant 0 : i32
    %c0_i32_0 = arith.constant 0 : i32
    return %arg0, %c0_i32 : i32, i32
  }
}

</mosaic_0001>

<llo_original>
// kernel: tpu_custom_call.1
$region0: #{tpu_custom_call.1}
  #allocation0 [shape = 'u32[]', space=smem, size = 0x4, offset = 0x4, fixed_abs, tag = 'smem constant byte address 0x4 - core index']
  #allocation1 [shape = 'u32[144,128]{1,0:T(1,128)}', space=vmem, size = 0x12000, scoped, tag = 'internal scratch']
  %s0 = inlined_call_operand.vmem [shape: s32[16,1], index: 0, kind: input, shape index: {}]
  %s1 = inlined_call_operand.hbm [shape: f32[128,128], index: 1, kind: input, shape index: {}]
  %s2 = inlined_call_operand.hbm [shape: f32[16,128], index: 2, kind: output, shape index: {}]
  %s3 = sld [smem:[#allocation0]]
  $region22: #{tpu_custom_call.1} parent=0
    _
  %s5 = ssub.s32 1, %s3
  %s6 = scalar_select 0, %s5, %s3
  $region1: #{tpu_custom_call.1} parent=0
    #allocation2 [shape = 'u8[65536]{0}', space=vmem, size = 0x10000, scoped, tag = 'input window, operand 1, single buffered']
    #allocation3 [shape = 's32[1]{0}', space=sflag, size = 0x4, scoped, tag = 'scoped memory for tpu_custom_call.1']
    #allocation4 [shape = 's32[1]{0}', space=sflag, size = 0x4, scoped, tag = 'scoped memory for tpu_custom_call.1']
    #allocation5 [shape = 'u8[8192]{0}', space=vmem, size = 0x2000, scoped, tag = 'output window, operand 0, single buffered']
    %7 = vsyncpa [#allocation3], 0
    %8 = vsyncpa [#allocation4], 0
    // Predicated region
    $region2: #{tpu_custom_call.1} parent=1 // pred_check
      _
    $region3: #{tpu_custom_call.1} parent=1 // pred_check_branch
      %10 = sbr.rel (0) target = $region5
    $region4: #{tpu_custom_call.1} parent=1 // pred_region
      _
    $region5: #{tpu_custom_call.1} parent=1 // pred_fallthru
      _
    // Predicated region
    $region6: #{tpu_custom_call.1} parent=1 // pred_check
      _
    $region7: #{tpu_custom_call.1} parent=1 // pred_check_branch
      %12 = sbr.rel (0) target = $region9
    $region8: #{tpu_custom_call.1} parent=1 // pred_region
      %s14 = ssub.s32 2048, 2048
      %15 = vsyncadd [#allocation3], %s14
      %s16 = sshll.u32 [#allocation2], 4
      %s17 = int_to_ptr.vmem [resolvable:$true] %s16
      %22 = dma.hbm_to_vmem [thread:$0]  %s1, 2048, %s17, [#allocation3], 128, 128, 8
    $region9: #{tpu_custom_call.1} parent=1 // pred_fallthru
      _
    // Predicated region
    $region10: #{tpu_custom_call.1} parent=1 // pred_check
      _
    $region11: #{tpu_custom_call.1} parent=1 // pred_check_branch
      %24 = sbr.rel (0) target = $region13
    $region12: #{tpu_custom_call.1} parent=1 // pred_region
      %25 = dma.done [#allocation3], 2048
    $region13: #{tpu_custom_call.1} parent=1 // pred_fallthru
      _
    %v26 = vld [vmem:[%s0] sm:$0xff]
    %v27 = vld [vmem:[%s0 + $0x8] sm:$0xff]
    %vm28 = vcmp.gt.s32.totalorder %v26, 0
    %v29 = vsel %vm28, %v26, 0
    %vm30 = vcmp.gt.s32.totalorder %v27, 0
    %v31 = vsel %vm30, %v27, 0
    %vm32 = vcmp.lt.s32.totalorder %v29, 63
    %v33 = vsel %vm32, %v29, 63
    %vm34 = vcmp.lt.s32.totalorder %v31, 63
    %v35 = vsel %vm34, %v31, 63
    %v36 = vlaneseq
    %v37 = vand.u32 %v36, 127
    %38 = vset.pattern.permute.xlu0 0
    %39 = vperm.xlu0 %38, %v33
    %v40 = vpop.permute.xlu0 %39
    %41 = vset.pattern.permute.xlu0 0
    %42 = vperm.xlu0 %41, %v35
    %v43 = vpop.permute.xlu0 %42
    %vm44 = vcmp.eq.s32.totalorder %v37, %v40
    %vm45 = vcmp.eq.s32.totalorder %v37, %v43
    %v46 = vsel %vm44, 11.313708, 0.0
    %v47 = vsel %vm45, 11.313708, 0.0
    %v48 = vld [vmem:[#allocation2] sm:$0xff]
    %v49 = vld [vmem:[#allocation2 + $0x8] sm:$0xff]
    %v50 = vld [vmem:[#allocation2 + $0x10] sm:$0xff]
    %v51 = vld [vmem:[#allocation2 + $0x18] sm:$0xff]
    %v52 = vld [vmem:[#allocation2 + $0x20] sm:$0xff]
    %v53 = vld [vmem:[#allocation2 + $0x28] sm:$0xff]
    %v54 = vld [vmem:[#allocation2 + $0x30] sm:$0xff]
    %v55 = vld [vmem:[#allocation2 + $0x38] sm:$0xff]
    %v56 = vld [vmem:[#allocation2 + $0x40] sm:$0xff]
    %v57 = vld [vmem:[#allocation2 + $0x48] sm:$0xff]
    %v58 = vld [vmem:[#allocation2 + $0x50] sm:$0xff]
    %v59 = vld [vmem:[#allocation2 + $0x58] sm:$0xff]
    %v60 = vld [vmem:[#allocation2 + $0x60] sm:$0xff]
    %v61 = vld [vmem:[#allocation2 + $0x68] sm:$0xff]
    %v62 = vld [vmem:[#allocation2 + $0x70] sm:$0xff]
    %v63 = vld [vmem:[#allocation2 + $0x78] sm:$0xff]
    %64 = vmatprep.subr.mxu0 0.0
    %65 = vmatpush1.msra.mxu0 %v48
    %66 = vmatprep.subr.mxu0 0.0
    %67 = vmatpush1.msra.mxu0 %v49
    %68 = vmatprep.subr.mxu0 0.0
    %69 = vmatpush1.msra.mxu0 %v50
    %70 = vmatprep.subr.mxu0 0.0
    %71 = vmatpush1.msra.mxu0 %v51
    %72 = vmatprep.subr.mxu0 0.0
    %73 = vmatpush1.msra.mxu0 %v52
    %74 = vmatprep.subr.mxu0 0.0
    %75 = vmatpush1.msra.mxu0 %v53
    %76 = vmatprep.subr.mxu0 0.0
    %77 = vmatpush1.msra.mxu0 %v54
    %78 = vmatprep.subr.mxu0 0.0
    %79 = vmatpush1.msra.mxu0 %v55
    %80 = vmatprep.subr.mxu0 0.0
    %81 = vmatpush1.msra.mxu0 %v56
    %82 = vmatprep.subr.mxu0 0.0
    %83 = vmatpush1.msra.mxu0 %v57
    %84 = vmatprep.subr.mxu0 0.0
    %85 = vmatpush1.msra.mxu0 %v58
    %86 = vmatprep.subr.mxu0 0.0
    %87 = vmatpush1.msra.mxu0 %v59
    %88 = vmatprep.subr.mxu0 0.0
    %89 = vmatpush1.msra.mxu0 %v60
    %90 = vmatprep.subr.mxu0 0.0
    %91 = vmatpush1.msra.mxu0 %v61
    %92 = vmatprep.subr.mxu0 0.0
    %93 = vmatpush1.msra.mxu0 %v62
    %94 = vmatprep.subr.mxu0 0.0
    %95 = vmatpush1.msra.mxu0 %v63
    %96 = vmatprep.subr.mxu0 0.0
    %97 = vmatpush1.msra.mxu0 0.0
    %98 = vmatprep.subr.mxu0 0.0
    %99 = vmatpush1.msra.mxu0 0.0
    %100 = vmatprep.subr.mxu0 0.0
    %101 = vmatpush1.msra.mxu0 0.0
    %102 = vmatprep.subr.mxu0 0.0
    %103 = vmatpush1.msra.mxu0 0.0
    %104 = vmatprep.subr.mxu0 0.0
    %105 = vmatpush1.msra.mxu0 0.0
    %106 = vmatprep.subr.mxu0 0.0
    %107 = vmatpush1.msra.mxu0 0.0
    %108 = vmatprep.subr.mxu0 0.0
    %109 = vmatpush1.msra.mxu0 0.0
    %110 = vmatprep.subr.mxu0 0.0
    %111 = vmatpush1.msra.mxu0 0.0
    %112 = vmatprep.subr.mxu0 0.0
    %113 = vmatpush1.msra.mxu0 0.0
    %114 = vmatprep.subr.mxu0 0.0
    %115 = vmatpush1.msra.mxu0 0.0
    %116 = vmatprep.subr.mxu0 0.0
    %117 = vmatpush1.msra.mxu0 0.0
    %118 = vmatprep.subr.mxu0 0.0
    %119 = vmatpush1.msra.mxu0 0.0
    %120 = vmatprep.subr.mxu0 0.0
    %121 = vmatpush1.msra.mxu0 0.0
    %122 = vmatprep.subr.mxu0 0.0
    %123 = vmatpush1.msra.mxu0 0.0
    %124 = vmatprep.subr.mxu0 0.0
    %125 = vmatpush1.msra.mxu0 0.0
    %126 = vmatprep.subr.mxu0 0.0
    %127 = vmatpush1.msra.mxu0 0.0
    %128 = vmatprep.mubr.f32.mxu0 0.0
    %129 = vmatmul.mubr.f32.gmra.mrb[0].mxu0 %v46
    %v130 = vpop.f32.mrb[0].mxu0
    %v131 = vadd.f32 0.0, %v130
    %v132 = vpop.f32.mrb[0].mxu0
    %133 = vmatprep.mubr.f32.mxu0 0.0
    %134 = vmatmul.mubr.f32.gmra.mrb[0].mxu0 %v47
    %v135 = vpop.f32.mrb[0].mxu0
    %v136 = vadd.f32 0.0, %v135
    %v137 = vpop.f32.mrb[0].mxu0
    %138 = vdwg.mxu0
    %139 = vst [vmem:[#allocation5] sm:$0xff] %v131
    %140 = vst [vmem:[#allocation5 + $0x8] sm:$0xff] %v136
    // Predicated region
    $region14: #{tpu_custom_call.1} parent=1 // pred_check
      _
    $region15: #{tpu_custom_call.1} parent=1 // pred_check_branch
      %142 = sbr.rel (0) target = $region17
    $region16: #{tpu_custom_call.1} parent=1 // pred_region
      %s144 = ssub.s32 256, 256
      %145 = vsyncadd [#allocation4], %s144
      %s146 = sshll.u32 [#allocation5], 4
      %s147 = int_to_ptr.vmem [resolvable:$true] %s146
      %152 = dma.vmem_to_hbm [thread:$0]  %s147, 256, %s2, [#allocation4], 128, 128, 8
    $region17: #{tpu_custom_call.1} parent=1 // pred_fallthru
      _
    // Predicated region
    $region18: #{tpu_custom_call.1} parent=1 // pred_check
      _
    $region19: #{tpu_custom_call.1} parent=1 // pred_check_branch
      %154 = sbr.rel (0) target = $region21
    $region20: #{tpu_custom_call.1} parent=1 // pred_region
      %155 = dma.done [#allocation4], 256
    $region21: #{tpu_custom_call.1} parent=1 // pred_fallthru
      _
    %156 = vsyncpa [#allocation3], 1
    %157 = vsyncpa [#allocation4], 1

</llo_original>
